<compile_context>
chip_gen: v7x
topology: tpu7x:2x2x1
jax: 0.10.0
libtpu: 0.0.40
codegen_flags: <defaults>
</compile_context>

<pallas_src>
import math

import jax
import jax.numpy as jnp
from jax.experimental import pallas as pl
from jax.experimental.pallas import tpu as pltpu


_LANE = 128
_SUBLANE = 8
# ~8 MiB of output bytes per grid step: amortizes the ~0.35 us per-step cost
# well past the measured 85% HBM-roofline point on v6e (and more so on v7x).
_TARGET_OUT_TILE_BYTES = 8 << 20
# Keep double-buffered tiles + the f32 matmul intermediate comfortably inside
# scoped VMEM on every generation (v7x: 64 MiB physical / 32 MiB default scoped).
_VMEM_TILE_BUDGET_BYTES = 16 << 20


def _round_up(x, m):
    return ((x + m - 1) // m) * m


def _cdiv(a, b):
    return (a + b - 1) // b


def _timef_embed_kernel(x_ref, w_ref, o_ref):
    # x_ref: (tm, d_inp)        row tile of the flattened (B*L, d_inp) input
    # w_ref: (d_inp, d_model)   full transposed Linear weight, lane-dense
    # o_ref: (tm, d_model)      lane-dense output tile
    # Native-dtype MXU feed; f32 accumulation; single cast on the way out.
    o_ref[...] = jnp.dot(
        x_ref[...], w_ref[...], preferred_element_type=jnp.float32
    ).astype(o_ref.dtype)


def _pick_row_tile(M, d_inp, d_model, in_itemsize, out_itemsize):
    """Row-tile size from a byte budget, capped by an explicit VMEM budget."""
    tm_budget = _TARGET_OUT_TILE_BYTES // (d_model * out_itemsize)
    per_row_vmem = (
        2 * d_inp * in_itemsize       # double-buffered input tile
        + 2 * d_model * out_itemsize  # double-buffered output tile
        + d_model * 4                 # f32 matmul result before the cast
    )
    tm_cap = _VMEM_TILE_BUDGET_BYTES // per_row_vmem
    tm = max(_SUBLANE, (min(tm_budget, tm_cap) // _SUBLANE) * _SUBLANE)

    if M <= tm:
        # Single block covering all rows (block == full dim is always legal,
        # even if M is not a multiple of 8). Single-TC chips want exactly one
        # grid step for small problems; no forced split here.
        return M, 1

    n_blocks = _cdiv(M, tm)
    # v7x shards a "parallel" grid across 2 TensorCores: avoid a small odd
    # block count (e.g. 3) leaving one core idle for a whole block's worth of
    # HBM time. Harmless on single-TC v5e/v6e.
    if n_blocks < 16 and n_blocks % 2 == 1:
        tm = max(_SUBLANE, _round_up(_cdiv(M, n_blocks + 1), _SUBLANE))
        n_blocks = _cdiv(M, tm)
    return tm, n_blocks


def time_feature_embedding(x, weight):
    """x: (B, L, d_inp), weight: (d_model, d_inp) -> (B, L, d_model).

    Matches TimeFeatureEmbedding.forward == nn.Linear(d_inp, d_model, bias=False).
    """
    B, L, d_inp = x.shape
    d_model = weight.shape[0]
    assert weight.shape == (d_model, d_inp), weight.shape

    out_dtype = x.dtype
    M = B * L
    x2 = x.reshape(M, d_inp)   # contiguous view: no HBM copy
    w = weight.T               # (d_inp, d_model): output features on the lane axis

    # Guarantee lane-dense (unmasked) output stores: pad the tiny weight's
    # output dim to a multiple of 128 when needed; slice once at the end.
    d_model_p = _round_up(d_model, _LANE)
    if d_model_p != d_model:
        w = jnp.pad(w, ((0, 0), (0, d_model_p - d_model)))

    in_itemsize = jnp.dtype(x.dtype).itemsize
    w_itemsize = jnp.dtype(w.dtype).itemsize
    out_itemsize = jnp.dtype(out_dtype).itemsize

    tm, n_blocks = _pick_row_tile(M, d_inp, d_model_p, in_itemsize, out_itemsize)

    # No row padding and no out[:M] slice: with a cdiv grid the trailing partial
    # block reads garbage rows (harmless) and its out-of-bounds output rows are
    # never written back, so the kernel output is exactly (M, d_model_p).
    grid = (n_blocks,)

    cost = pl.CostEstimate(
        flops=2 * M * d_inp * d_model_p,
        transcendentals=0,
        bytes_accessed=(
            M * d_inp * in_itemsize
            + d_inp * d_model_p * w_itemsize
            + M * d_model_p * out_itemsize
        ),
    )

    out = pl.pallas_call(
        _timef_embed_kernel,
        out_shape=jax.ShapeDtypeStruct((M, d_model_p), out_dtype),
        grid_spec=pltpu.PrefetchScalarGridSpec(
            num_scalar_prefetch=0,
            grid=grid,
            in_specs=[
                pl.BlockSpec((tm, d_inp), lambda i: (i, 0)),
                pl.BlockSpec((d_inp, d_model_p), lambda i: (0, 0)),
            ],
            out_specs=pl.BlockSpec((tm, d_model_p), lambda i: (i, 0)),
        ),
        compiler_params=pltpu.CompilerParams(
            dimension_semantics=("parallel",),
            vmem_limit_bytes=32 * 1024 * 1024,
        ),
        cost_estimate=cost,
    )(x2, w)

    if d_model_p != d_model:
        out = out[:, :d_model]   # only hit when d_model is not lane-aligned
    return out.reshape(B, L, d_model)


def _reference(x, weight):
    # Pure-JAX reference mirroring nn.Linear(d_inp, d_model, bias=False).
    return jnp.einsum("bli,oi->blo", x, weight)


if __name__ == "__main__":
    # TimeFeatureEmbedding(d_model=128, embed_type='timeF', freq='h'):
    #   freq='h' -> d_inp = 4 time features per step.
    B, L = 2, 16
    d_inp, d_model = 4, 128

    key = jax.random.PRNGKey(0)
    kx, kw = jax.random.split(key)
    x = jax.random.normal(kx, (B, L, d_inp), dtype=jnp.float32)

    # nn.Linear default init: U(-1/sqrt(d_inp), 1/sqrt(d_inp)); weight (d_model, d_inp).
    bound = 1.0 / math.sqrt(d_inp)
    weight = jax.random.uniform(
        kw, (d_model, d_inp), dtype=jnp.float32, minval=-bound, maxval=bound
    )

    out = jax.block_until_ready(time_feature_embedding(x, weight))

    ref = _reference(x, weight)
    assert out.shape == ref.shape, (out.shape, ref.shape)
    assert jnp.allclose(out, ref, atol=1e-5, rtol=1e-5), "mismatch vs reference"

    print("KERNEL_OK")
</pallas_src>

<mosaic_0001>
module attributes {stable_mosaic.version = 11 : i64} {
  func.func @_timef_embed_kernel(%arg0: i32, %arg1: memref<32x4xf32, #tpu.memory_space<vmem>>, %arg2: memref<4x128xf32, #tpu.memory_space<vmem>>, %arg3: memref<32x128xf32, #tpu.memory_space<vmem>>) attributes {dimension_semantics = [#tpu.dimension_semantics<parallel>], iteration_bounds = array<i64: 1>, scalar_prefetch = 0 : i64, scratch_operands = 0 : i64, tpu.core_type = #tpu.core_type<tc>, window_params = [{transform_indices = @transform_0, window_bounds = array<i64: 32, 4>}, {pipeline_mode = #tpu.pipeline_mode<synchronous>, transform_indices = @transform_1, window_bounds = array<i64: 4, 128>}, {transform_indices = @transform_2, window_bounds = array<i64: 32, 128>}]} {
    %c0 = arith.constant 0 : index
    %c0_0 = arith.constant 0 : index
    %0 = vector.load %arg1[%c0, %c0_0] : memref<32x4xf32, #tpu.memory_space<vmem>>, vector<32x4xf32>
    %c0_1 = arith.constant 0 : index
    %c0_2 = arith.constant 0 : index
    %1 = vector.load %arg2[%c0_1, %c0_2] : memref<4x128xf32, #tpu.memory_space<vmem>>, vector<4x128xf32>
    %cst = arith.constant dense<0.000000e+00> : vector<32x128xf32>
    %2 = tpu.matmul %0, %1, %cst {dimension_numbers = #tpu.dot_dimension_numbers<[1], [0], [0], [1], [0, 0, 1, 1], [], []>} : vector<32x4xf32>, vector<4x128xf32>, vector<32x128xf32> -> vector<32x128xf32>
    %c0_3 = arith.constant 0 : index
    %c0_4 = arith.constant 0 : index
    %3 = vector.load %arg3[%c0_3, %c0_4] : memref<32x128xf32, #tpu.memory_space<vmem>>, vector<32x128xf32>
    tpu.vector_store %arg3[%c0_3, %c0_4], %2 {strides = array<i32>} : memref<32x128xf32, #tpu.memory_space<vmem>>, vector<32x128xf32>,
    return
  }
  func.func @transform_0(%arg0: i32) -> (i32, i32) {
    %c0_i32 = arith.constant 0 : i32
    %c0_i32_0 = arith.constant 0 : i32
    return %arg0, %c0_i32 : i32, i32
  }
  func.func @transform_1(%arg0: i32) -> (i32, i32) {
    %c0_i32 = arith.constant 0 : i32
    %c0_i32_0 = arith.constant 0 : i32
    %c0_i32_1 = arith.constant 0 : i32
    return %c0_i32, %c0_i32_0 : i32, i32
  }
  func.func @transform_2(%arg0: i32) -> (i32, i32) {
    %c0_i32 = arith.constant 0 : i32
    %c0_i32_0 = arith.constant 0 : i32
    return %arg0, %c0_i32 : i32, i32
  }
}

</mosaic_0001>

<llo_original>
// kernel: tpu_custom_call.1
$region0: #{tpu_custom_call.1}
  #allocation0 [shape = 'u32[]', space=smem, size = 0x4, offset = 0x4, fixed_abs, tag = 'smem constant byte address 0x4 - core index']
  #allocation1 [shape = 'u32[144,128]{1,0:T(1,128)}', space=vmem, size = 0x12000, scoped, tag = 'internal scratch']
  %s0 = inlined_call_operand.vmem [shape: f32[32,4], index: 0, kind: input, shape index: {}]
  %s1 = inlined_call_operand.vmem [shape: f32[4,128], index: 1, kind: input, shape index: {}]
  %s2 = inlined_call_operand.hbm [shape: f32[32,128], index: 2, kind: output, shape index: {}]
  %s3 = sld [smem:[#allocation0]]
  $region18: #{tpu_custom_call.1} parent=0
    _
  %s5 = ssub.s32 1, %s3
  %s6 = scalar_select 0, %s5, %s3
  $region1: #{tpu_custom_call.1} parent=0
    #allocation2 [shape = 'u8[16384]{0}', space=vmem, size = 0x4000, scoped, tag = 'output window, operand 0, single buffered']
    #allocation3 [shape = 's32[1]{0}', space=sflag, size = 0x4, scoped, tag = 'scoped memory for tpu_custom_call.1']
    %7 = vsyncpa [#allocation3], 0
    // Predicated region
    $region2: #{tpu_custom_call.1} parent=1 // pred_check
      _
    $region3: #{tpu_custom_call.1} parent=1 // pred_check_branch
      %9 = sbr.rel (0) target = $region5
    $region4: #{tpu_custom_call.1} parent=1 // pred_region
      _
    $region5: #{tpu_custom_call.1} parent=1 // pred_fallthru
      _
    // Predicated region
    $region6: #{tpu_custom_call.1} parent=1 // pred_check
      _
    $region7: #{tpu_custom_call.1} parent=1 // pred_check_branch
      %11 = sbr.rel (0) target = $region9
    $region8: #{tpu_custom_call.1} parent=1 // pred_region
      _
    $region9: #{tpu_custom_call.1} parent=1 // pred_fallthru
      _
    %v12 = vld [vmem:[%s0] sm:$0xff]
    %v13 = vld [vmem:[%s0 + $0x8] sm:$0xff]
    %v14 = vld [vmem:[%s0 + $0x10] sm:$0xff]
    %v15 = vld [vmem:[%s0 + $0x18] sm:$0xff]
    %v16 = vld [vmem:[%s1] sm:$0xf]
    %vm17 = vcmask 31744
    %v19 = vsel %vm17, %v12, 0
    %v22 = vsel %vm17, %v13, 0
    %v25 = vsel %vm17, %v14, 0
    %v28 = vsel %vm17, %v15, 0
    %vm30 = vcmask 1043456
    %v32 = vsel %vm30, %v16, 0
    %34 = vmatprep.subr.mxu0 0.0
    %35 = vmatpush1.msra.mxu0 %v32
    %36 = vmatprep.subr.mxu0 0.0
    %37 = vmatpush1.msra.mxu0 0.0
    %38 = vmatprep.subr.mxu0 0.0
    %39 = vmatpush1.msra.mxu0 0.0
    %40 = vmatprep.subr.mxu0 0.0
    %41 = vmatpush1.msra.mxu0 0.0
    %42 = vmatprep.subr.mxu0 0.0
    %43 = vmatpush1.msra.mxu0 0.0
    %44 = vmatprep.subr.mxu0 0.0
    %45 = vmatpush1.msra.mxu0 0.0
    %46 = vmatprep.subr.mxu0 0.0
    %47 = vmatpush1.msra.mxu0 0.0
    %48 = vmatprep.subr.mxu0 0.0
    %49 = vmatpush1.msra.mxu0 0.0
    %50 = vmatprep.subr.mxu0 0.0
    %51 = vmatpush1.msra.mxu0 0.0
    %52 = vmatprep.subr.mxu0 0.0
    %53 = vmatpush1.msra.mxu0 0.0
    %54 = vmatprep.subr.mxu0 0.0
    %55 = vmatpush1.msra.mxu0 0.0
    %56 = vmatprep.subr.mxu0 0.0
    %57 = vmatpush1.msra.mxu0 0.0
    %58 = vmatprep.subr.mxu0 0.0
    %59 = vmatpush1.msra.mxu0 0.0
    %60 = vmatprep.subr.mxu0 0.0
    %61 = vmatpush1.msra.mxu0 0.0
    %62 = vmatprep.subr.mxu0 0.0
    %63 = vmatpush1.msra.mxu0 0.0
    %64 = vmatprep.subr.mxu0 0.0
    %65 = vmatpush1.msra.mxu0 0.0
    %66 = vmatprep.subr.mxu0 0.0
    %67 = vmatpush1.msra.mxu0 0.0
    %68 = vmatprep.subr.mxu0 0.0
    %69 = vmatpush1.msra.mxu0 0.0
    %70 = vmatprep.subr.mxu0 0.0
    %71 = vmatpush1.msra.mxu0 0.0
    %72 = vmatprep.subr.mxu0 0.0
    %73 = vmatpush1.msra.mxu0 0.0
    %74 = vmatprep.subr.mxu0 0.0
    %75 = vmatpush1.msra.mxu0 0.0
    %76 = vmatprep.subr.mxu0 0.0
    %77 = vmatpush1.msra.mxu0 0.0
    %78 = vmatprep.subr.mxu0 0.0
    %79 = vmatpush1.msra.mxu0 0.0
    %80 = vmatprep.subr.mxu0 0.0
    %81 = vmatpush1.msra.mxu0 0.0
    %82 = vmatprep.subr.mxu0 0.0
    %83 = vmatpush1.msra.mxu0 0.0
    %84 = vmatprep.subr.mxu0 0.0
    %85 = vmatpush1.msra.mxu0 0.0
    %86 = vmatprep.subr.mxu0 0.0
    %87 = vmatpush1.msra.mxu0 0.0
    %88 = vmatprep.subr.mxu0 0.0
    %89 = vmatpush1.msra.mxu0 0.0
    %90 = vmatprep.subr.mxu0 0.0
    %91 = vmatpush1.msra.mxu0 0.0
    %92 = vmatprep.subr.mxu0 0.0
    %93 = vmatpush1.msra.mxu0 0.0
    %94 = vmatprep.subr.mxu0 0.0
    %95 = vmatpush1.msra.mxu0 0.0
    %96 = vmatprep.subr.mxu0 0.0
    %97 = vmatpush1.msra.mxu0 0.0
    %98 = vmatprep.mubr.f32.mxu0 0.0
    %99 = vmatmul.mubr.f32.gmra.mrb[0].mxu0 %v19
    %v100 = vpop.f32.mrb[0].mxu0
    %v101 = vadd.f32 0.0, %v100
    %v102 = vpop.f32.mrb[0].mxu0
    %103 = vmatprep.mubr.f32.mxu0 0.0
    %104 = vmatmul.mubr.f32.gmra.mrb[0].mxu0 %v22
    %v105 = vpop.f32.mrb[0].mxu0
    %v106 = vadd.f32 0.0, %v105
    %v107 = vpop.f32.mrb[0].mxu0
    %108 = vmatprep.mubr.f32.mxu0 0.0
    %109 = vmatmul.mubr.f32.gmra.mrb[0].mxu0 %v25
    %v110 = vpop.f32.mrb[0].mxu0
    %v111 = vadd.f32 0.0, %v110
    %v112 = vpop.f32.mrb[0].mxu0
    %113 = vmatprep.mubr.f32.mxu0 0.0
    %114 = vmatmul.mubr.f32.gmra.mrb[0].mxu0 %v28
    %v115 = vpop.f32.mrb[0].mxu0
    %v116 = vadd.f32 0.0, %v115
    %v117 = vpop.f32.mrb[0].mxu0
    %118 = vdwg.mxu0
    %119 = vst [vmem:[#allocation2] sm:$0xff] %v101
    %120 = vst [vmem:[#allocation2 + $0x8] sm:$0xff] %v106
    %121 = vst [vmem:[#allocation2 + $0x10] sm:$0xff] %v111
    %122 = vst [vmem:[#allocation2 + $0x18] sm:$0xff] %v116
    // Predicated region
    $region10: #{tpu_custom_call.1} parent=1 // pred_check
      _
    $region11: #{tpu_custom_call.1} parent=1 // pred_check_branch
      %124 = sbr.rel (0) target = $region13
    $region12: #{tpu_custom_call.1} parent=1 // pred_region
      %s126 = ssub.s32 512, 512
      %127 = vsyncadd [#allocation3], %s126
      %s128 = sshll.u32 [#allocation2], 4
      %s129 = int_to_ptr.vmem [resolvable:$true] %s128
      %134 = dma.vmem_to_hbm [thread:$0]  %s129, 512, %s2, [#allocation3], 128, 128, 8
    $region13: #{tpu_custom_call.1} parent=1 // pred_fallthru
      _
    // Predicated region
    $region14: #{tpu_custom_call.1} parent=1 // pred_check
      _
    $region15: #{tpu_custom_call.1} parent=1 // pred_check_branch
      %136 = sbr.rel (0) target = $region17
    $region16: #{tpu_custom_call.1} parent=1 // pred_region
      %137 = dma.done [#allocation3], 512
    $region17: #{tpu_custom_call.1} parent=1 // pred_fallthru
      _
    %138 = vsyncpa [#allocation3], 1

</llo_original>
